<compile_context>
chip_gen: v5e
topology: v5e:2x2
jax: 0.10.0
libtpu: 0.0.40
codegen_flags: <defaults>
</compile_context>

<pallas_src>
import math

import jax
import jax.numpy as jnp
from jax.experimental import pallas as pl
from jax.experimental.pallas import tpu as pltpu

NEAR_INF = 1e20  # neginf(float32) == -1e20 in the reference module


# ----------------------------------------------------------------------------
# Kernel bodies
# ----------------------------------------------------------------------------
def _attention_body(q, k, v, bias, wo_ref, bo_ref, out_ref, *,
                    n_heads, dim, q_len, k_len, block_b):
    """Per-head attention + fused output projection.

    q:    (block_b, q_len, dim) bf16, already scaled by 1/sqrt(dh) via Wq
    k:    (block_b, k_len, dim) bf16
    v:    (block_b, k_len, dim) bf16
    bias: (block_b, 1, k_len)   f32 additive mask (0 attend / -1e20 masked)
    """
    dh = dim // n_heads
    rows = block_b * q_len

    # Hoist the mask broadcast out of the head loop: JAX does not CSE
    # broadcast_in_dim, so the implicit (Bt,1,Tk)->(Bt,Tq,Tk) broadcast would
    # otherwise be materialized once per head.
    bias_b = jnp.broadcast_to(bias, (block_b, q_len, k_len))

    # Static (unrolled) head loop with lane slices (no (T,H,dh) transposes).
    # NOTE: per-head slices are only layout-free when dh is 128-aligned; for
    # smaller dh the MXU pads K/N — at the module's typical sizes the kernel is
    # not MXU-bound, so this is acceptable.
    ctx_heads = []
    for h in range(n_heads):
        sl = slice(h * dh, (h + 1) * dh)
        qh = q[:, :, sl]                              # (Bt, Tq, dh) bf16
        kh = k[:, :, sl]                              # (Bt, Tk, dh) bf16
        vh = v[:, :, sl]                              # (Bt, Tk, dh) bf16

        # TODO(synk): if a bundle dump shows per-(batch,head) vxpose of K
        # saturating the XLU, bulk-transpose the projected K slab once per grid
        # step and switch this to the NN einsum 'bqd,bdk->bqk'.
        s = jnp.einsum('bqd,bkd->bqk', qh, kh,
                       preferred_element_type=jnp.float32)   # (Bt, Tq, Tk) f32
        s = s + bias_b                                        # additive mask
        m = jnp.max(s, axis=-1, keepdims=True)
        e = jnp.exp(s - m)
        denom = jnp.sum(e, axis=-1, keepdims=True)            # (Bt, Tq, 1)

        # Unnormalized context, then deferred normalization (one reciprocal
        # per row on the EUP instead of a divide over the (Tq,Tk) tile).
        ctx = jnp.einsum('bqk,bkd->bqd', e.astype(jnp.bfloat16), vh,
                         preferred_element_type=jnp.float32)  # (Bt, Tq, dh)
        ctx = ctx * pl.reciprocal(denom, approx=True)
        ctx_heads.append(ctx.reshape(rows, dh).astype(jnp.bfloat16))

    # Fused output projection: one (rows, D) x (D, D) matmul instead of H
    # K=dh matmuls with a full-width f32 accumulator read-modify-written H times.
    ctx_all = jnp.concatenate(ctx_heads, axis=-1)             # (rows, dim) bf16
    out = jnp.dot(ctx_all, wo_ref[...],
                  preferred_element_type=jnp.float32) + bo_ref[...]
    out_ref[...] = out.reshape(block_b, q_len, dim).astype(out_ref.dtype)


def make_self_attn_kernel(n_heads, dim, q_len, block_b):
    """query == key == value: single fused (D, 3D) QKV projection."""
    def kernel(x_ref, bias_ref, wqkv_ref, bqkv_ref, wo_ref, bo_ref, out_ref):
        rows = block_b * q_len
        x = x_ref[...].reshape(rows, dim).astype(jnp.bfloat16)
        # One-time downcast to bf16 right after the projection epilogue.
        qkv = (jnp.dot(x, wqkv_ref[...], preferred_element_type=jnp.float32)
               + bqkv_ref[...]).astype(jnp.bfloat16)
        q = qkv[:, :dim].reshape(block_b, q_len, dim)
        k = qkv[:, dim:2 * dim].reshape(block_b, q_len, dim)
        v = qkv[:, 2 * dim:].reshape(block_b, q_len, dim)
        _attention_body(q, k, v, bias_ref[...], wo_ref, bo_ref, out_ref,
                        n_heads=n_heads, dim=dim, q_len=q_len, k_len=q_len,
                        block_b=block_b)
    return kernel


def make_kv_shared_kernel(n_heads, dim, q_len, k_len, block_b):
    """key == value (cross-attention): fused (D, 2D) K|V projection."""
    def kernel(q_ref, kv_ref, bias_ref, wq_ref, bq_ref, wkv_ref, bkv_ref,
               wo_ref, bo_ref, out_ref):
        q_rows = block_b * q_len
        k_rows = block_b * k_len
        xq = q_ref[...].reshape(q_rows, dim).astype(jnp.bfloat16)
        xkv = kv_ref[...].reshape(k_rows, dim).astype(jnp.bfloat16)
        q = (jnp.dot(xq, wq_ref[...], preferred_element_type=jnp.float32)
             + bq_ref[...]).astype(jnp.bfloat16)
        kv = (jnp.dot(xkv, wkv_ref[...], preferred_element_type=jnp.float32)
              + bkv_ref[...]).astype(jnp.bfloat16)
        q = q.reshape(block_b, q_len, dim)
        k = kv[:, :dim].reshape(block_b, k_len, dim)
        v = kv[:, dim:].reshape(block_b, k_len, dim)
        _attention_body(q, k, v, bias_ref[...], wo_ref, bo_ref, out_ref,
                        n_heads=n_heads, dim=dim, q_len=q_len, k_len=k_len,
                        block_b=block_b)
    return kernel


def make_separate_kernel(n_heads, dim, q_len, k_len, block_b):
    """Fully general case: distinct query / key / value tensors."""
    def kernel(q_ref, k_ref, v_ref, bias_ref, wq_ref, bq_ref, wk_ref, bk_ref,
               wv_ref, bv_ref, wo_ref, bo_ref, out_ref):
        q_rows = block_b * q_len
        k_rows = block_b * k_len
        xq = q_ref[...].reshape(q_rows, dim).astype(jnp.bfloat16)
        xk = k_ref[...].reshape(k_rows, dim).astype(jnp.bfloat16)
        xv = v_ref[...].reshape(k_rows, dim).astype(jnp.bfloat16)
        q = (jnp.dot(xq, wq_ref[...], preferred_element_type=jnp.float32)
             + bq_ref[...]).astype(jnp.bfloat16).reshape(block_b, q_len, dim)
        k = (jnp.dot(xk, wk_ref[...], preferred_element_type=jnp.float32)
             + bk_ref[...]).astype(jnp.bfloat16).reshape(block_b, k_len, dim)
        v = (jnp.dot(xv, wv_ref[...], preferred_element_type=jnp.float32)
             + bv_ref[...]).astype(jnp.bfloat16).reshape(block_b, k_len, dim)
        _attention_body(q, k, v, bias_ref[...], wo_ref, bo_ref, out_ref,
                        n_heads=n_heads, dim=dim, q_len=q_len, k_len=k_len,
                        block_b=block_b)
    return kernel


# ----------------------------------------------------------------------------
# Wrapper
# ----------------------------------------------------------------------------
def _pick_block_b(batch, q_len, k_len, max_rows=512):
    """Largest divisor of batch keeping the per-step row slab <= max_rows,
    while keeping the grid at least 2 steps long when batch allows it (so the
    batch axis can be sharded across v7x's two TensorCores)."""
    max_bb = max(1, batch // 2)
    best = 1
    for d in range(1, max_bb + 1):
        if batch % d == 0 and d * max(q_len, k_len) <= max_rows:
            best = d
    return best


def _vmem_limit_bytes(block_b, q_len, k_len, dim):
    """Rough per-step VMEM estimate with slack, clamped to [32 MiB, 128 MiB]."""
    act = block_b * (2 * q_len + 2 * k_len) * dim * 4       # in/out blocks (f32)
    scores = block_b * q_len * k_len * 4
    weights = 4 * dim * dim * 2 + 4 * dim * 4               # bf16 W, f32 b
    est = 3 * (act + scores + weights) + (16 << 20)
    return int(min(max(est, 32 << 20), 128 << 20))


def multi_head_attention(params, query, key=None, value=None, mask=None, *,
                         n_heads):
    """query: (B,Tq,D); key/value: (B,Tk,D) or None (PyTorch defaults); mask: (B,Tk)."""
    assert mask is not None, 'Mask is None, please specify a mask'
    if key is None and value is None:
        key = value = query
    elif value is None:
        value = key

    B, Tq, D = query.shape
    Tk = key.shape[1]
    dh = D // n_heads
    scale = math.sqrt(dh)

    # Host-side weight prep: transpose (y = x @ W), fold 1/sqrt(dh) into Wq/bq,
    # cast weights to bf16 (f32 accumulation happens on the MXU).
    wq_t = (params['wq'].T / scale).astype(jnp.bfloat16)
    wk_t = params['wk'].T.astype(jnp.bfloat16)
    wv_t = params['wv'].T.astype(jnp.bfloat16)
    wo_t = params['wo'].T.astype(jnp.bfloat16)
    bq = (params['bq'] / scale).reshape(1, D).astype(jnp.float32)
    bk = params['bk'].reshape(1, D).astype(jnp.float32)
    bv = params['bv'].reshape(1, D).astype(jnp.float32)
    bo = params['bo'].reshape(1, D).astype(jnp.float32)

    # Additive mask bias: 0 where attended, -1e20 where masked.
    bias = jnp.where(mask == 0, -NEAR_INF, 0.0).astype(jnp.float32)
    bias = bias.reshape(B, 1, Tk)

    block_b = _pick_block_b(B, Tq, Tk)
    grid = (B // block_b,)

    # Constant-index weight/bias specs: single-buffered (a second buffer buys
    # nothing for a constant index_map and doubles weight VMEM).
    def wspec(shape):
        return pl.BlockSpec(shape, lambda b: (0,) * len(shape),
                            pipeline_mode=pl.Buffered(1))

    act_spec = lambda t_len: pl.BlockSpec((block_b, t_len, D),
                                          lambda b: (b, 0, 0))
    bias_spec = pl.BlockSpec((block_b, 1, Tk), lambda b: (b, 0, 0))
    out_spec = pl.BlockSpec((block_b, Tq, D), lambda b: (b, 0, 0))

    self_attn = (key is query) and (value is query)
    kv_shared = (value is key)

    if self_attn:
        wqkv = jnp.concatenate([wq_t, wk_t, wv_t], axis=1)       # (D, 3D)
        bqkv = jnp.concatenate([bq, bk, bv], axis=1)             # (1, 3D)
        kernel = make_self_attn_kernel(n_heads, D, Tq, block_b)
        in_specs = [act_spec(Tq), bias_spec,
                    wspec((D, 3 * D)), wspec((1, 3 * D)),
                    wspec((D, D)), wspec((1, D))]
        inputs = (query, bias, wqkv, bqkv, wo_t, bo)
    elif kv_shared:
        wkv = jnp.concatenate([wk_t, wv_t], axis=1)              # (D, 2D)
        bkv = jnp.concatenate([bk, bv], axis=1)                  # (1, 2D)
        kernel = make_kv_shared_kernel(n_heads, D, Tq, Tk, block_b)
        in_specs = [act_spec(Tq), act_spec(Tk), bias_spec,
                    wspec((D, D)), wspec((1, D)),
                    wspec((D, 2 * D)), wspec((1, 2 * D)),
                    wspec((D, D)), wspec((1, D))]
        inputs = (query, key, bias, wq_t, bq, wkv, bkv, wo_t, bo)
    else:
        kernel = make_separate_kernel(n_heads, D, Tq, Tk, block_b)
        in_specs = [act_spec(Tq), act_spec(Tk), act_spec(Tk), bias_spec,
                    wspec((D, D)), wspec((1, D)),
                    wspec((D, D)), wspec((1, D)),
                    wspec((D, D)), wspec((1, D)),
                    wspec((D, D)), wspec((1, D))]
        inputs = (query, key, value, bias, wq_t, bq, wk_t, bk, wv_t, bv,
                  wo_t, bo)

    return pl.pallas_call(
        kernel,
        out_shape=jax.ShapeDtypeStruct((B, Tq, D), query.dtype),
        grid_spec=pltpu.PrefetchScalarGridSpec(
            num_scalar_prefetch=0,
            grid=grid,
            in_specs=in_specs,
            out_specs=out_spec),
        compiler_params=pltpu.CompilerParams(
            dimension_semantics=("parallel",),
            vmem_limit_bytes=_vmem_limit_bytes(block_b, Tq, Tk, D)),
    )(*inputs)


# ----------------------------------------------------------------------------
# Pure-JAX reference (mirrors the PyTorch forward in f32)
# ----------------------------------------------------------------------------
def reference_mha(params, query, key, value, mask, n_heads):
    B, Tq, D = query.shape
    Tk = key.shape[1]
    dh = D // n_heads
    scale = math.sqrt(dh)

    def lin(x, w, b):
        return x @ w.T + b

    def heads(t, seq):
        return t.reshape(B, seq, n_heads, dh).transpose(0, 2, 1, 3).reshape(
            B * n_heads, seq, dh)

    q = heads(lin(query, params['wq'], params['bq']), Tq)
    k = heads(lin(key, params['wk'], params['bk']), Tk)
    v = heads(lin(value, params['wv'], params['bv']), Tk)

    dot = jnp.einsum('bqd,bkd->bqk', q / scale, k)
    attn_mask = (mask == 0).reshape(B, 1, 1, Tk)
    attn_mask = jnp.broadcast_to(attn_mask, (B, n_heads, Tq, Tk)).reshape(
        B * n_heads, Tq, Tk)
    dot = jnp.where(attn_mask, -NEAR_INF, dot)
    w = jax.nn.softmax(dot, axis=-1)
    ctx = jnp.einsum('bqk,bkd->bqd', w, v)
    ctx = ctx.reshape(B, n_heads, Tq, dh).transpose(0, 2, 1, 3).reshape(
        B, Tq, D)
    return lin(ctx, params['wo'], params['bo'])


def init_params(key, dim):
    ks = jax.random.split(key, 8)
    xavier_std = math.sqrt(2.0 / (dim + dim))   # xavier_normal_ for (dim, dim)
    bias_bound = 1.0 / math.sqrt(dim)           # PyTorch default Linear bias init

    def w(k):
        return (jax.random.normal(k, (dim, dim)) * xavier_std).astype(
            jnp.float32)

    def b(k):
        return jax.random.uniform(k, (dim,), minval=-bias_bound,
                                  maxval=bias_bound).astype(jnp.float32)

    return {
        'wq': w(ks[0]), 'bq': b(ks[1]),
        'wk': w(ks[2]), 'bk': b(ks[3]),
        'wv': w(ks[4]), 'bv': b(ks[5]),
        'wo': w(ks[6]), 'bo': b(ks[7]),
    }


if __name__ == "__main__":
    B, T, D, H = 2, 8, 32, 2

    root = jax.random.PRNGKey(0)
    k_params, k_q, k_mask, k_mem, k_mmask, k_val = jax.random.split(root, 6)

    params = init_params(k_params, D)
    query = jax.random.normal(k_q, (B, T, D), dtype=jnp.float32)
    mask = (jax.random.uniform(k_mask, (B, T)) > 0.3).astype(jnp.int32)
    mask = mask.at[:, 0].set(1)  # ensure at least one visible key per row

    # Tolerance is loosened vs the f32 reference because the kernel runs its
    # matmuls in bf16 (f32 accumulation); softmax/mask math remains f32.
    TOL = 5e-2

    # 1) Self-attention (fused (D,3D) QKV path) — the module's default path.
    out = multi_head_attention(params, query, mask=mask, n_heads=H)
    out = jax.block_until_ready(out)
    ref = reference_mha(params, query, query, query, mask, H)
    assert out.shape == (B, T, D)
    assert jnp.allclose(out, ref, atol=TOL, rtol=TOL), "self-attn mismatch"

    # 2) Cross-attention with key == value (fused (D,2D) K|V path).
    Tk = 16
    memory = jax.random.normal(k_mem, (B, Tk, D), dtype=jnp.float32)
    mem_mask = (jax.random.uniform(k_mmask, (B, Tk)) > 0.3).astype(jnp.int32)
    mem_mask = mem_mask.at[:, 0].set(1)
    out_x = multi_head_attention(params, query, memory, mask=mem_mask,
                                 n_heads=H)
    out_x = jax.block_until_ready(out_x)
    ref_x = reference_mha(params, query, memory, memory, mem_mask, H)
    assert jnp.allclose(out_x, ref_x, atol=TOL, rtol=TOL), "cross-attn mismatch"

    # 3) Fully general case: distinct query / key / value tensors.
    value2 = jax.random.normal(k_val, (B, Tk, D), dtype=jnp.float32)
    out_s = multi_head_attention(params, query, memory, value2,
                                 mask=mem_mask, n_heads=H)
    out_s = jax.block_until_ready(out_s)
    ref_s = reference_mha(params, query, memory, value2, mem_mask, H)
    assert jnp.allclose(out_s, ref_s, atol=TOL, rtol=TOL), "separate-qkv mismatch"

    print("KERNEL_OK")
</pallas_src>

<mosaic_0001>
module attributes {stable_mosaic.version = 11 : i64} {
  func.func @kernel(%arg0: i32, %arg1: memref<1x8x32xf32, #tpu.memory_space<vmem>>, %arg2: memref<1x1x8xf32, #tpu.memory_space<vmem>>, %arg3: memref<32x96xbf16, #tpu.memory_space<vmem>>, %arg4: memref<1x96xf32, #tpu.memory_space<vmem>>, %arg5: memref<32x32xbf16, #tpu.memory_space<vmem>>, %arg6: memref<1x32xf32, #tpu.memory_space<vmem>>, %arg7: memref<1x8x32xf32, #tpu.memory_space<vmem>>) attributes {dimension_semantics = [#tpu.dimension_semantics<parallel>], iteration_bounds = array<i64: 2>, scalar_prefetch = 0 : i64, scratch_operands = 0 : i64, tpu.core_type = #tpu.core_type<tc>, window_params = [{transform_indices = @transform_0, window_bounds = array<i64: 1, 8, 32>}, {transform_indices = @transform_1, window_bounds = array<i64: 1, 1, 8>}, {pipeline_mode = #tpu.pipeline_mode<synchronous>, transform_indices = @transform_2, window_bounds = array<i64: 32, 96>}, {pipeline_mode = #tpu.pipeline_mode<synchronous>, transform_indices = @transform_3, window_bounds = array<i64: 1, 96>}, {pipeline_mode = #tpu.pipeline_mode<synchronous>, transform_indices = @transform_4, window_bounds = array<i64: 32, 32>}, {pipeline_mode = #tpu.pipeline_mode<synchronous>, transform_indices = @transform_5, window_bounds = array<i64: 1, 32>}, {transform_indices = @transform_6, window_bounds = array<i64: 1, 8, 32>}]} {
    %c0 = arith.constant 0 : index
    %c0_0 = arith.constant 0 : index
    %c0_1 = arith.constant 0 : index
    %0 = vector.load %arg1[%c0, %c0_0, %c0_1] : memref<1x8x32xf32, #tpu.memory_space<vmem>>, vector<1x8x32xf32>
    %1 = vector.shape_cast %0 : vector<1x8x32xf32> to vector<8x32xf32>
    %2 = arith.truncf %1 : vector<8x32xf32> to vector<8x32xbf16>
    %c0_2 = arith.constant 0 : index
    %c0_3 = arith.constant 0 : index
    %3 = vector.load %arg3[%c0_2, %c0_3] : memref<32x96xbf16, #tpu.memory_space<vmem>>, vector<32x96xbf16>
    %cst = arith.constant dense<0.000000e+00> : vector<8x96xf32>
    %4 = tpu.matmul %2, %3, %cst {dimension_numbers = #tpu.dot_dimension_numbers<[1], [0], [0], [1], [0, 0, 1, 1], [], []>} : vector<8x32xbf16>, vector<32x96xbf16>, vector<8x96xf32> -> vector<8x96xf32>
    %c0_4 = arith.constant 0 : index
    %c0_5 = arith.constant 0 : index
    %5 = vector.load %arg4[%c0_4, %c0_5] : memref<1x96xf32, #tpu.memory_space<vmem>>, vector<1x96xf32>
    %6 = vector.broadcast %5 : vector<1x96xf32> to vector<8x96xf32>
    %7 = arith.addf %4, %6 : vector<8x96xf32>
    %8 = arith.truncf %7 : vector<8x96xf32> to vector<8x96xbf16>
    %9 = vector.extract_strided_slice %8 {offsets = [0, 0], sizes = [8, 32], strides = [1, 1]} : vector<8x96xbf16> to vector<8x32xbf16>
    %10 = vector.shape_cast %9 : vector<8x32xbf16> to vector<1x8x32xbf16>
    %11 = vector.extract_strided_slice %8 {offsets = [0, 32], sizes = [8, 32], strides = [1, 1]} : vector<8x96xbf16> to vector<8x32xbf16>
    %12 = vector.shape_cast %11 : vector<8x32xbf16> to vector<1x8x32xbf16>
    %13 = vector.extract_strided_slice %8 {offsets = [0, 64], sizes = [8, 32], strides = [1, 1]} : vector<8x96xbf16> to vector<8x32xbf16>
    %14 = vector.shape_cast %13 : vector<8x32xbf16> to vector<1x8x32xbf16>
    %c0_6 = arith.constant 0 : index
    %c0_7 = arith.constant 0 : index
    %c0_8 = arith.constant 0 : index
    %15 = vector.load %arg2[%c0_6, %c0_7, %c0_8] : memref<1x1x8xf32, #tpu.memory_space<vmem>>, vector<1x1x8xf32>
    %16 = vector.shape_cast %15 : vector<1x1x8xf32> to vector<1x1x8xf32>
    %17 = vector.broadcast %16 : vector<1x1x8xf32> to vector<1x8x8xf32>
    %18 = vector.extract_strided_slice %10 {offsets = [0, 0, 0], sizes = [1, 8, 16], strides = [1, 1, 1]} : vector<1x8x32xbf16> to vector<1x8x16xbf16>
    %19 = vector.extract_strided_slice %12 {offsets = [0, 0, 0], sizes = [1, 8, 16], strides = [1, 1, 1]} : vector<1x8x32xbf16> to vector<1x8x16xbf16>
    %20 = vector.extract_strided_slice %14 {offsets = [0, 0, 0], sizes = [1, 8, 16], strides = [1, 1, 1]} : vector<1x8x32xbf16> to vector<1x8x16xbf16>
    "tpu.trace_start"() <{level = 10 : i32, message = "bqd,bkd->bqk"}> : () -> ()
    %cst_9 = arith.constant dense<0.000000e+00> : vector<1x8x8xf32>
    %21 = tpu.matmul %18, %19, %cst_9 {dimension_numbers = #tpu.dot_dimension_numbers<[2], [2], [1], [1], [0, 0, 0, 1, 1, 1], [0], [0]>} : vector<1x8x16xbf16>, vector<1x8x16xbf16>, vector<1x8x8xf32> -> vector<1x8x8xf32>
    "tpu.trace_stop"() : () -> ()
    %22 = arith.addf %21, %17 : vector<1x8x8xf32>
    %cst_10 = arith.constant dense<0xFF800000> : vector<1x8xf32>
    %23 = vector.multi_reduction <maximumf>, %22, %cst_10 [2] : vector<1x8x8xf32> to vector<1x8xf32>
    %24 = vector.shape_cast %23 : vector<1x8xf32> to vector<1x8x1xf32>
    %25 = vector.broadcast %24 : vector<1x8x1xf32> to vector<1x8x8xf32>
    %26 = arith.subf %22, %25 : vector<1x8x8xf32>
    %27 = math.exp %26 : vector<1x8x8xf32>
    %cst_11 = arith.constant dense<0.000000e+00> : vector<1x8xf32>
    %28 = vector.multi_reduction <add>, %27, %cst_11 [2] : vector<1x8x8xf32> to vector<1x8xf32>
    %29 = vector.shape_cast %28 : vector<1x8xf32> to vector<1x8x1xf32>
    %30 = arith.truncf %27 : vector<1x8x8xf32> to vector<1x8x8xbf16>
    "tpu.trace_start"() <{level = 10 : i32, message = "bqk,bkd->bqd"}> : () -> ()
    %cst_12 = arith.constant dense<0.000000e+00> : vector<1x8x16xf32>
    %31 = tpu.matmul %30, %20, %cst_12 {dimension_numbers = #tpu.dot_dimension_numbers<[2], [1], [1], [2], [0, 0, 0, 1, 1, 2], [0], [0]>} : vector<1x8x8xbf16>, vector<1x8x16xbf16>, vector<1x8x16xf32> -> vector<1x8x16xf32>
    "tpu.trace_stop"() : () -> ()
    %32 = tpu.reciprocal %29 {approx = true} : vector<1x8x1xf32> -> vector<1x8x1xf32>
    %33 = vector.broadcast %32 : vector<1x8x1xf32> to vector<1x8x16xf32>
    %34 = arith.mulf %31, %33 : vector<1x8x16xf32>
    %35 = vector.shape_cast %34 : vector<1x8x16xf32> to vector<8x16xf32>
    %36 = arith.truncf %35 : vector<8x16xf32> to vector<8x16xbf16>
    %37 = vector.extract_strided_slice %10 {offsets = [0, 0, 16], sizes = [1, 8, 16], strides = [1, 1, 1]} : vector<1x8x32xbf16> to vector<1x8x16xbf16>
    %38 = vector.extract_strided_slice %12 {offsets = [0, 0, 16], sizes = [1, 8, 16], strides = [1, 1, 1]} : vector<1x8x32xbf16> to vector<1x8x16xbf16>
    %39 = vector.extract_strided_slice %14 {offsets = [0, 0, 16], sizes = [1, 8, 16], strides = [1, 1, 1]} : vector<1x8x32xbf16> to vector<1x8x16xbf16>
    "tpu.trace_start"() <{level = 10 : i32, message = "bqd,bkd->bqk"}> : () -> ()
    %cst_13 = arith.constant dense<0.000000e+00> : vector<1x8x8xf32>
    %40 = tpu.matmul %37, %38, %cst_13 {dimension_numbers = #tpu.dot_dimension_numbers<[2], [2], [1], [1], [0, 0, 0, 1, 1, 1], [0], [0]>} : vector<1x8x16xbf16>, vector<1x8x16xbf16>, vector<1x8x8xf32> -> vector<1x8x8xf32>
    "tpu.trace_stop"() : () -> ()
    %41 = arith.addf %40, %17 : vector<1x8x8xf32>
    %cst_14 = arith.constant dense<0xFF800000> : vector<1x8xf32>
    %42 = vector.multi_reduction <maximumf>, %41, %cst_14 [2] : vector<1x8x8xf32> to vector<1x8xf32>
    %43 = vector.shape_cast %42 : vector<1x8xf32> to vector<1x8x1xf32>
    %44 = vector.broadcast %43 : vector<1x8x1xf32> to vector<1x8x8xf32>
    %45 = arith.subf %41, %44 : vector<1x8x8xf32>
    %46 = math.exp %45 : vector<1x8x8xf32>
    %cst_15 = arith.constant dense<0.000000e+00> : vector<1x8xf32>
    %47 = vector.multi_reduction <add>, %46, %cst_15 [2] : vector<1x8x8xf32> to vector<1x8xf32>
    %48 = vector.shape_cast %47 : vector<1x8xf32> to vector<1x8x1xf32>
    %49 = arith.truncf %46 : vector<1x8x8xf32> to vector<1x8x8xbf16>
    "tpu.trace_start"() <{level = 10 : i32, message = "bqk,bkd->bqd"}> : () -> ()
    %cst_16 = arith.constant dense<0.000000e+00> : vector<1x8x16xf32>
    %50 = tpu.matmul %49, %39, %cst_16 {dimension_numbers = #tpu.dot_dimension_numbers<[2], [1], [1], [2], [0, 0, 0, 1, 1, 2], [0], [0]>} : vector<1x8x8xbf16>, vector<1x8x16xbf16>, vector<1x8x16xf32> -> vector<1x8x16xf32>
    "tpu.trace_stop"() : () -> ()
    %51 = tpu.reciprocal %48 {approx = true} : vector<1x8x1xf32> -> vector<1x8x1xf32>
    %52 = vector.broadcast %51 : vector<1x8x1xf32> to vector<1x8x16xf32>
    %53 = arith.mulf %50, %52 : vector<1x8x16xf32>
    %54 = vector.shape_cast %53 : vector<1x8x16xf32> to vector<8x16xf32>
    %55 = arith.truncf %54 : vector<8x16xf32> to vector<8x16xbf16>
    %56 = tpu.concatenate %36, %55 in 1 : vector<8x16xbf16>, vector<8x16xbf16> -> vector<8x32xbf16>
    %c0_17 = arith.constant 0 : index
    %c0_18 = arith.constant 0 : index
    %57 = vector.load %arg5[%c0_17, %c0_18] : memref<32x32xbf16, #tpu.memory_space<vmem>>, vector<32x32xbf16>
    %cst_19 = arith.constant dense<0.000000e+00> : vector<8x32xf32>
    %58 = tpu.matmul %56, %57, %cst_19 {dimension_numbers = #tpu.dot_dimension_numbers<[1], [0], [0], [1], [0, 0, 1, 1], [], []>} : vector<8x32xbf16>, vector<32x32xbf16>, vector<8x32xf32> -> vector<8x32xf32>
    %c0_20 = arith.constant 0 : index
    %c0_21 = arith.constant 0 : index
    %59 = vector.load %arg6[%c0_20, %c0_21] : memref<1x32xf32, #tpu.memory_space<vmem>>, vector<1x32xf32>
    %60 = vector.broadcast %59 : vector<1x32xf32> to vector<8x32xf32>
    %61 = arith.addf %58, %60 : vector<8x32xf32>
    %62 = vector.shape_cast %61 : vector<8x32xf32> to vector<1x8x32xf32>
    %c0_22 = arith.constant 0 : index
    %c0_23 = arith.constant 0 : index
    %c0_24 = arith.constant 0 : index
    %63 = vector.load %arg7[%c0_22, %c0_23, %c0_24] : memref<1x8x32xf32, #tpu.memory_space<vmem>>, vector<1x8x32xf32>
    tpu.vector_store %arg7[%c0_22, %c0_23, %c0_24], %62 {strides = array<i32>} : memref<1x8x32xf32, #tpu.memory_space<vmem>>, vector<1x8x32xf32>,
    return
  }
  func.func @transform_0(%arg0: i32) -> (i32, i32, i32) {
    %c0_i32 = arith.constant 0 : i32
    %c0_i32_0 = arith.constant 0 : i32
    %c0_i32_1 = arith.constant 0 : i32
    return %arg0, %c0_i32, %c0_i32_0 : i32, i32, i32
  }
  func.func @transform_1(%arg0: i32) -> (i32, i32, i32) {
    %c0_i32 = arith.constant 0 : i32
    %c0_i32_0 = arith.constant 0 : i32
    %c0_i32_1 = arith.constant 0 : i32
    return %arg0, %c0_i32, %c0_i32_0 : i32, i32, i32
  }
  func.func @transform_2(%arg0: i32) -> (i32, i32) {
    %c0_i32 = arith.constant 0 : i32
    %c0_i32_0 = arith.constant 0 : i32
    %c0_i32_1 = arith.constant 0 : i32
    return %c0_i32, %c0_i32_0 : i32, i32
  }
  func.func @transform_3(%arg0: i32) -> (i32, i32) {
    %c0_i32 = arith.constant 0 : i32
    %c0_i32_0 = arith.constant 0 : i32
    %c0_i32_1 = arith.constant 0 : i32
    return %c0_i32, %c0_i32_0 : i32, i32
  }
  func.func @transform_4(%arg0: i32) -> (i32, i32) {
    %c0_i32 = arith.constant 0 : i32
    %c0_i32_0 = arith.constant 0 : i32
    %c0_i32_1 = arith.constant 0 : i32
    return %c0_i32, %c0_i32_0 : i32, i32
  }
  func.func @transform_5(%arg0: i32) -> (i32, i32) {
    %c0_i32 = arith.constant 0 : i32
    %c0_i32_0 = arith.constant 0 : i32
    %c0_i32_1 = arith.constant 0 : i32
    return %c0_i32, %c0_i32_0 : i32, i32
  }
  func.func @transform_6(%arg0: i32) -> (i32, i32, i32) {
    %c0_i32 = arith.constant 0 : i32
    %c0_i32_0 = arith.constant 0 : i32
    %c0_i32_1 = arith.constant 0 : i32
    return %arg0, %c0_i32, %c0_i32_0 : i32, i32, i32
  }
}

</mosaic_0001>

<llo_original>
// kernel: tpu_custom_call.1
$region0: #{tpu_custom_call.1}
  #allocation0 [shape = 'u32[]', space=smem, size = 0x4, offset = 0x4, fixed_abs, tag = 'smem constant byte address 0x4 - core index']
  #allocation1 [shape = 'u32[72,128]{1,0:T(1,128)}', space=vmem, size = 0x9000, scoped, tag = 'internal scratch']
  %s0 = inlined_call_operand.hbm [shape: f32[2,8,32], index: 0, kind: input, shape index: {}]
  %s1 = inlined_call_operand.hbm [shape: f32[2,1,8], index: 1, kind: input, shape index: {}]
  %s2 = inlined_call_operand.hbm [shape: bf16[32,96], index: 2, kind: input, shape index: {}]
  %s3 = inlined_call_operand.vmem [shape: f32[1,96], index: 3, kind: input, shape index: {}]
  %s4 = inlined_call_operand.hbm [shape: bf16[32,32], index: 4, kind: input, shape index: {}]
  %s5 = inlined_call_operand.vmem [shape: f32[1,32], index: 5, kind: input, shape index: {}]
  %s6 = inlined_call_operand.hbm [shape: f32[2,8,32], index: 6, kind: output, shape index: {}]
  %s7 = sld [smem:[#allocation0]]
  $region73: #{tpu_custom_call.1} parent=0
    _
  %s9 = ssub.s32 1, %s7
  %s10 = scalar_select 0, %s9, %s7
  $region1: #{tpu_custom_call.1} parent=0
    #allocation2 [shape = 'u8[8192]{0}', space=vmem, size = 0x2000, scoped, tag = 'input window, operand 0']
    #allocation3 [shape = 's32[2]{0}', space=sflag, size = 0x8, scoped, tag = 'scoped memory for tpu_custom_call.1']
    #allocation4 [shape = 's32[2]{0}', space=sflag, size = 0x8, scoped, tag = 'scoped memory for tpu_custom_call.1']
    #allocation5 [shape = 'u8[1024]{0}', space=vmem, size = 0x400, scoped, tag = 'input window, operand 1']
    #allocation6 [shape = 's32[2]{0}', space=sflag, size = 0x8, scoped, tag = 'scoped memory for tpu_custom_call.1']
    #allocation7 [shape = 'u8[8192]{0}', space=vmem, size = 0x2000, scoped, tag = 'input window, operand 2, single buffered']
    #allocation8 [shape = 'u8[8192]{0}', space=vmem, size = 0x2000, scoped, tag = 'input window, operand 4, single buffered']
    #allocation9 [shape = 's32[1]{0}', space=sflag, size = 0x4, scoped, tag = 'scoped memory for tpu_custom_call.1']
    #allocation10 [shape = 'u8[8192]{0}', space=vmem, size = 0x2000, scoped, tag = 'output window, operand 0']
    %11 = vsyncpa [#allocation3], 0
    %s12 = scalar_lea.sflag [#allocation3], 1
    %13 = vsyncpa %s12, 0
    %14 = vsyncpa [#allocation6], 0
    %s15 = scalar_lea.sflag [#allocation6], 1
    %16 = vsyncpa %s15, 0
    %17 = vsyncpa [#allocation9], 0
    %18 = vsyncpa [#allocation4], 0
    %s19 = scalar_lea.sflag [#allocation4], 1
    %20 = vsyncpa %s19, 0
    loop: start=0, step=1, limit=4
    $region2: #{tpu_custom_call.1} parent=1 // loop_pre_header
      _
    $region3: #{tpu_custom_call.1} parent=1 // loop_header
      %s22 = sphi 0, %s26
      %p23 = scmp.ge.s32.totalorder %s22, 4
      %s32 = sphi 0, %s34
      %s35 = sphi 0, %s32
      %s36 = sphi 0, %s35
      %s52 = sphi 0, %s36
      %s58 = sphi 0, %s60
      %s61 = sphi 0, %s58
      %s62 = sphi 0, %s61
      %s78 = sphi 0, %s62
      %s82 = sphi 0, %s82
      %s84 = sphi 0, %s82
      %s85 = sphi 0, %s84
      %s99 = sphi 0, %s85
      %s103 = sphi 0, %s103
      %s105 = sphi 0, %s103
      %s106 = sphi 0, %s105
      %s120 = sphi 0, %s106
      %s124 = sphi 0, %s124
      %s126 = sphi 0, %s124
      %s127 = sphi 0, %s126
      %s141 = sphi 0, %s127
      %s145 = sphi 0, %s145
      %s147 = sphi 0, %s145
      %s148 = sphi 0, %s147
      %s162 = sphi 0, %s148
      %s168 = sphi 0, %s170
      %s171 = sphi 0, %s168
      %s172 = sphi 0, %s171
      %s188 = sphi 0, %s172
    $region4: #{tpu_custom_call.1} parent=1 // loop_header_branch
      %25 = sbr.rel (%p23) target = $region8
    $region5: #{tpu_custom_call.1} parent=1 // loop_body
      %s27 = ssub.s32 %s22, 1
      %s28 = ssub.s32 %s22, 2
      %s29 = sadd.s32 %s22, 1
      %s30 = ssub.s32 %s22, %s29
      %p31 = scmp.eq.s32.totalorder %s30, 0
      %s33 = sadd.s32 %s32, 1
      %s34 = scalar_select %p31, %s32, %s33
      %p37 = pneg %p31
      %p38 = scmp.eq.s32.totalorder %s22, 1
      %p39 = por %p37, %p38
      %p40 = scmp.ne.s32.totalorder %s32, %s35
      %p41 = scmp.eq.s32.totalorder %s22, 0
      %p42 = por %p40, %p41
      %p43 = scmp.ne.s32.totalorder %s32, %s35
      %p44 = scmp.eq.s32.totalorder %s27, 1
      %p45 = por %p43, %p44
      %p46 = scmp.ne.s32.totalorder %s35, %s36
      %p47 = scmp.eq.s32.totalorder %s27, 0
      %p48 = por %p46, %p47
      %p49 = scmp.ne.s32.totalorder %s35, %s36
      %p50 = scmp.eq.s32.totalorder %s28, 1
      %p51 = por %p49, %p50
      %p53 = scmp.ne.s32.totalorder %s36, %s52
      %p54 = scmp.eq.s32.totalorder %s28, 0
      %p55 = por %p53, %p54
      %s56 = ssub.s32 %s22, %s29
      %p57 = scmp.eq.s32.totalorder %s56, 0
      %s59 = sadd.s32 %s58, 1
      %s60 = scalar_select %p57, %s58, %s59
      %p63 = pneg %p57
      %p64 = scmp.eq.s32.totalorder %s22, 1
      %p65 = por %p63, %p64
      %p66 = scmp.ne.s32.totalorder %s58, %s61
      %p67 = scmp.eq.s32.totalorder %s22, 0
      %p68 = por %p66, %p67
      %p69 = scmp.ne.s32.totalorder %s58, %s61
      %p70 = scmp.eq.s32.totalorder %s27, 1
      %p71 = por %p69, %p70
      %p72 = scmp.ne.s32.totalorder %s61, %s62
      %p73 = scmp.eq.s32.totalorder %s27, 0
      %p74 = por %p72, %p73
      %p75 = scmp.ne.s32.totalorder %s61, %s62
      %p76 = scmp.eq.s32.totalorder %s28, 1
      %p77 = por %p75, %p76
      %p79 = scmp.ne.s32.totalorder %s62, %s78
      %p80 = scmp.eq.s32.totalorder %s28, 0
      %p81 = por %p79, %p80
      %s83 = sadd.s32 %s82, 1
      %p86 = scmp.eq.s32.totalorder %s22, 1
      %p87 = scmp.ne.s32.totalorder %s82, %s84
      %p88 = scmp.eq.s32.totalorder %s22, 0
      %p89 = por %p87, %p88
      %p90 = scmp.ne.s32.totalorder %s82, %s84
      %p91 = scmp.eq.s32.totalorder %s27, 1
      %p92 = por %p90, %p91
      %p93 = scmp.ne.s32.totalorder %s84, %s85
      %p94 = scmp.eq.s32.totalorder %s27, 0
      %p95 = por %p93, %p94
      %p96 = scmp.ne.s32.totalorder %s84, %s85
      %p97 = scmp.eq.s32.totalorder %s28, 1
      %p98 = por %p96, %p97
      %p100 = scmp.ne.s32.totalorder %s85, %s99
      %p101 = scmp.eq.s32.totalorder %s28, 0
      %p102 = por %p100, %p101
      %s104 = sadd.s32 %s103, 1
      %p107 = scmp.eq.s32.totalorder %s22, 1
      %p108 = scmp.ne.s32.totalorder %s103, %s105
      %p109 = scmp.eq.s32.totalorder %s22, 0
      %p110 = por %p108, %p109
      %p111 = scmp.ne.s32.totalorder %s103, %s105
      %p112 = scmp.eq.s32.totalorder %s27, 1
      %p113 = por %p111, %p112
      %p114 = scmp.ne.s32.totalorder %s105, %s106
      %p115 = scmp.eq.s32.totalorder %s27, 0
      %p116 = por %p114, %p115
      %p117 = scmp.ne.s32.totalorder %s105, %s106
      %p118 = scmp.eq.s32.totalorder %s28, 1
      %p119 = por %p117, %p118
      %p121 = scmp.ne.s32.totalorder %s106, %s120
      %p122 = scmp.eq.s32.totalorder %s28, 0
      %p123 = por %p121, %p122
      %s125 = sadd.s32 %s124, 1
      %p128 = scmp.eq.s32.totalorder %s22, 1
      %p129 = scmp.ne.s32.totalorder %s124, %s126
      %p130 = scmp.eq.s32.totalorder %s22, 0
      %p131 = por %p129, %p130
      %p132 = scmp.ne.s32.totalorder %s124, %s126
      %p133 = scmp.eq.s32.totalorder %s27, 1
      %p134 = por %p132, %p133
      %p135 = scmp.ne.s32.totalorder %s126, %s127
      %p136 = scmp.eq.s32.totalorder %s27, 0
      %p137 = por %p135, %p136
      %p138 = scmp.ne.s32.totalorder %s126, %s127
      %p139 = scmp.eq.s32.totalorder %s28, 1
      %p140 = por %p138, %p139
      %p142 = scmp.ne.s32.totalorder %s127, %s141
      %p143 = scmp.eq.s32.totalorder %s28, 0
      %p144 = por %p142, %p143
      %s146 = sadd.s32 %s145, 1
      %p149 = scmp.eq.s32.totalorder %s22, 1
      %p150 = scmp.ne.s32.totalorder %s145, %s147
      %p151 = scmp.eq.s32.totalorder %s22, 0
      %p152 = por %p150, %p151
      %p153 = scmp.ne.s32.totalorder %s145, %s147
      %p154 = scmp.eq.s32.totalorder %s27, 1
      %p155 = por %p153, %p154
      %p156 = scmp.ne.s32.totalorder %s147, %s148
      %p157 = scmp.eq.s32.totalorder %s27, 0
      %p158 = por %p156, %p157
      %p159 = scmp.ne.s32.totalorder %s147, %s148
      %p160 = scmp.eq.s32.totalorder %s28, 1
      %p161 = por %p159, %p160
      %p163 = scmp.ne.s32.totalorder %s148, %s162
      %p164 = scmp.eq.s32.totalorder %s28, 0
      %p165 = por %p163, %p164
      %s166 = ssub.s32 %s22, %s29
      %p167 = scmp.eq.s32.totalorder %s166, 0
      %s169 = sadd.s32 %s168, 1
      %s170 = scalar_select %p167, %s168, %s169
      %p173 = pneg %p167
      %p174 = scmp.eq.s32.totalorder %s22, 1
      %p175 = por %p173, %p174
      %p176 = scmp.ne.s32.totalorder %s168, %s171
      %p177 = scmp.eq.s32.totalorder %s22, 0
      %p178 = por %p176, %p177
      %p179 = scmp.ne.s32.totalorder %s168, %s171
      %p180 = scmp.eq.s32.totalorder %s27, 1
      %p181 = por %p179, %p180
      %p182 = scmp.ne.s32.totalorder %s171, %s172
      %p183 = scmp.eq.s32.totalorder %s27, 0
      %p184 = por %p182, %p183
      %p185 = scmp.ne.s32.totalorder %s171, %s172
      %p186 = scmp.eq.s32.totalorder %s28, 1
      %p187 = por %p185, %p186
      %p189 = scmp.ne.s32.totalorder %s172, %s188
      %p190 = scmp.eq.s32.totalorder %s28, 0
      %p191 = por %p189, %p190
      %p192 = scmp.le.s32.totalorder 1, %s22
      %p193 = scmp.lt.s32.totalorder %s22, 3
      %p194 = pnand %p192, %p193
      %p195 = pneg %p194
      // Predicated region
      $region9: #{tpu_custom_call.1} parent=5 // pred_check
        _
      $region10: #{tpu_custom_call.1} parent=5 // pred_check_branch
        %197 = sbr.rel (%p194) target = $region12
      $region11: #{tpu_custom_call.1} parent=5 // pred_region
        %s198 = ssub.s32 %s22, 1
        // Predicated region
        $region13: #{tpu_custom_call.1} parent=11 // pred_check
          %p199 = pneg %p95
        $region14: #{tpu_custom_call.1} parent=11 // pred_check_branch
          %201 = sbr.rel (%p199) target = $region16
        $region15: #{tpu_custom_call.1} parent=11 // pred_region
          %203 = vsyncadd [#allocation6], 0
          %s204 = sshll.u32 %s2, 4
          %s205 = int_to_ptr.hbm [resolvable:$true] %s204
          %s206 = sshll.u32 [#allocation7], 4
          %s207 = int_to_ptr.vmem [resolvable:$true] %s206
          %212 = dma.hbm_to_vmem [thread:$0]  %s205, 256, %s207, [#allocation6], 64, 64, 4
        $region16: #{tpu_custom_call.1} parent=11 // pred_fallthru
          _
        // Predicated region
        $region17: #{tpu_custom_call.1} parent=11 // pred_check
          %p213 = pneg %p116
        $region18: #{tpu_custom_call.1} parent=11 // pred_check_branch
          %215 = sbr.rel (%p213) target = $region20
        $region19: #{tpu_custom_call.1} parent=11 // pred_region
          _
        $region20: #{tpu_custom_call.1} parent=11 // pred_fallthru
          _
        // Predicated region
        $region21: #{tpu_custom_call.1} parent=11 // pred_check
          %p216 = pneg %p137
        $region22: #{tpu_custom_call.1} parent=11 // pred_check_branch
          %218 = sbr.rel (%p216) target = $region24
        $region23: #{tpu_custom_call.1} parent=11 // pred_region
          %220 = vsyncadd [#allocation9], 0
          %s221 = sshll.u32 %s4, 4
          %s222 = int_to_ptr.hbm [resolvable:$true] %s221
          %s223 = sshll.u32 [#allocation8], 4
          %s224 = int_to_ptr.vmem [resolvable:$true] %s223
          %229 = dma.hbm_to_vmem [thread:$0]  %s222, 256, %s224, [#allocation9], 64, 64, 4
        $region24: #{tpu_custom_call.1} parent=11 // pred_fallthru
          _
        // Predicated region
        $region25: #{tpu_custom_call.1} parent=11 // pred_check
          %p230 = pneg %p158
        $region26: #{tpu_custom_call.1} parent=11 // pred_check_branch
          %232 = sbr.rel (%p230) target = $region28
        $region27: #{tpu_custom_call.1} parent=11 // pred_region
          _
        $region28: #{tpu_custom_call.1} parent=11 // pred_fallthru
          _
      $region12: #{tpu_custom_call.1} parent=5 // pred_fallthru
        _
      %p233 = scmp.lt.s32.totalorder %s22, 2
      // Predicated region
      $region29: #{tpu_custom_call.1} parent=5 // pred_check
        %p234 = pneg %p233
      $region30: #{tpu_custom_call.1} parent=5 // pred_check_branch
        %236 = sbr.rel (%p234) target = $region32
      $region31: #{tpu_custom_call.1} parent=5 // pred_region
        // Predicated region
        $region33: #{tpu_custom_call.1} parent=31 // pred_check
          %p237 = pneg %p42
        $region34: #{tpu_custom_call.1} parent=31 // pred_check_branch
          %239 = sbr.rel (%p237) target = $region36
        $region35: #{tpu_custom_call.1} parent=31 // pred_region
          %s240 = sand.u32 %s32, 1
          %s241 = scalar_lea.sflag [#allocation3], %s240
          %s242 = sand.u32 %s32, 1
          %s243 = smul.addr %s242, 8
          %s244 = scalar_lea.vmem [#allocation2], %s243
          %246 = vsyncadd %s241, 0
          %s247 = smul.addr %s22, 8
          %s248 = scalar_lea.hbm %s0, %s247
          %s250 = sshll.u32 %s248, 4
          %s251 = int_to_ptr.hbm [resolvable:$true] %s250
          %s252 = sshll.u32 %s244, 4
          %s253 = int_to_ptr.vmem [resolvable:$true] %s252
          %255 = dma.hbm_to_vmem [thread:$0]  %s251, 128, %s253, %s241
        $region36: #{tpu_custom_call.1} parent=31 // pred_fallthru
          _
        // Predicated region
        $region37: #{tpu_custom_call.1} parent=31 // pred_check
          %p256 = pneg %p68
        $region38: #{tpu_custom_call.1} parent=31 // pred_check_branch
          %258 = sbr.rel (%p256) target = $region40
        $region39: #{tpu_custom_call.1} parent=31 // pred_region
          %s259 = sand.u32 %s22, 1
          %s260 = scalar_lea.sflag [#allocation6], %s259
          %s261 = sand.u32 %s58, 1
          %s262 = scalar_lea.vmem [#allocation5], %s261
          %264 = vsyncadd %s260, 0
          %s265 = scalar_lea.hbm %s1, %s22
          %s267 = sshll.u32 %s265, 4
          %s268 = int_to_ptr.hbm [resolvable:$true] %s267
          %s269 = sshll.u32 %s262, 4
          %s270 = int_to_ptr.vmem [resolvable:$true] %s269
          %272 = dma.hbm_to_vmem [thread:$0]  %s268, 16, %s270, %s260
        $region40: #{tpu_custom_call.1} parent=31 // pred_fallthru
          _
      $region32: #{tpu_custom_call.1} parent=5 // pred_fallthru
        _
      %p273 = scmp.le.s32.totalorder 1, %s22
      %p274 = scmp.lt.s32.totalorder %s22, 3
      %p275 = pnand %p273, %p274
      %p276 = pneg %p275
      // Predicated region
      $region41: #{tpu_custom_call.1} parent=5 // pred_check
        _
      $region42: #{tpu_custom_call.1} parent=5 // pred_check_branch
        %278 = sbr.rel (%p275) target = $region44
      $region43: #{tpu_custom_call.1} parent=5 // pred_region
        %s279 = ssub.s32 %s22, 1
        %s280 = sand.u32 %s35, 1
        %s281 = scalar_lea.sflag [#allocation3], %s280
        %s282 = sand.u32 %s35, 1
        %s283 = smul.addr %s282, 8
        %s284 = scalar_lea.vmem [#allocation2], %s283
        // Predicated region
        $region45: #{tpu_custom_call.1} parent=43 // pred_check
          %p285 = pneg %p48
        $region46: #{tpu_custom_call.1} parent=43 // pred_check_branch
          %287 = sbr.rel (%p285) target = $region48
        $region47: #{tpu_custom_call.1} parent=43 // pred_region
          %289 = dma.done %s281, 128
        $region48: #{tpu_custom_call.1} parent=43 // pred_fallthru
          _
        %s290 = sand.u32 %s27, 1
        %s291 = scalar_lea.sflag [#allocation6], %s290
        %s292 = sand.u32 %s61, 1
        %s293 = scalar_lea.vmem [#allocation5], %s292
        // Predicated region
        $region49: #{tpu_custom_call.1} parent=43 // pred_check
          %p294 = pneg %p74
        $region50: #{tpu_custom_call.1} parent=43 // pred_check_branch
          %296 = sbr.rel (%p294) target = $region52
        $region51: #{tpu_custom_call.1} parent=43 // pred_region
          %298 = dma.done %s291, 16
        $region52: #{tpu_custom_call.1} parent=43 // pred_fallthru
          _
        // Predicated region
        $region53: #{tpu_custom_call.1} parent=43 // pred_check
          %p299 = pneg %p95
        $region54: #{tpu_custom_call.1} parent=43 // pred_check_branch
          %301 = sbr.rel (%p299) target = $region56
        $region55: #{tpu_custom_call.1} parent=43 // pred_region
          %303 = dma.done [#allocation6], 256
        $region56: #{tpu_custom_call.1} parent=43 // pred_fallthru
          _
        // Predicated region
        $region57: #{tpu_custom_call.1} parent=43 // pred_check
          %p304 = pneg %p137
        $region58: #{tpu_custom_call.1} parent=43 // pred_check_branch
          %306 = sbr.rel (%p304) target = $region60
        $region59: #{tpu_custom_call.1} parent=43 // pred_region
          %308 = dma.done [#allocation9], 256
        $region60: #{tpu_custom_call.1} parent=43 // pred_fallthru
          _
        %s309 = sand.u32 %s35, 1
        %s310 = scalar_lea.sflag [#allocation3], %s309
        %s311 = sand.u32 %s35, 1
        %s312 = smul.addr %s311, 8
        %s313 = scalar_lea.vmem [#allocation2], %s312
        %p314 = pneg %p48
        %p315 = pneg %p45
        %s316 = sand.u32 %s27, 1
        %s317 = scalar_lea.sflag [#allocation6], %s316
        %s318 = sand.u32 %s61, 1
        %s319 = scalar_lea.vmem [#allocation5], %s318
        %p320 = pneg %p74
        %p321 = pneg %p71
        %p322 = pneg %p95
        %p323 = pneg %p92
        %p324 = pneg %p116
        %p325 = pneg %p113
        %p326 = pneg %p137
        %p327 = pneg %p134
        %p328 = pneg %p158
        %p329 = pneg %p155
        %p330 = pneg %p184
        %p331 = pneg %p181
        %s332 = sand.u32 %s171, 1
        %s333 = scalar_lea.sflag [#allocation4], %s332
        %s334 = sand.u32 %s171, 1
        %s335 = smul.addr %s334, 8
        %s336 = scalar_lea.vmem [#allocation10], %s335
        %v338 = vld [vmem:[%s284] sm:$0xff]
        %v339 = vpack.c.bf16 %v338, %v338
        %v340 = vld [vmem:[#allocation7] sm:$0xf]
        %v341 = vld [vmem:[#allocation7 + $0x4] sm:$0xf]
        %v342 = vld [vmem:[#allocation7 + $0x8] sm:$0xf]
        %v343 = vld [vmem:[#allocation7 + $0xc] sm:$0xf]
        %v344 = vld [vmem:[%s3] sm:$0x1]
        %v346 = vperm.slane %v344, 0
        %v352 = vunpack.c.l.b16 %v340
        %v353 = vunpack.c.l.b16 %v341
        %v354 = vunpack.c.l.b16 %v342
        %v355 = vunpack.c.l.b16 %v343
        %v356 = vpack.c.b16 %v353, %v352
        %v357 = vpack.c.b16 %v355, %v354
        %vm360 = vcmask 261120
        %v362 = vsel %vm360, %v339, 0
        %364 = vmatpush.bf16.msra.mxu0 0
        %365 = vmatpush.bf16.msra.mxu0 0
        %366 = vmatpush.bf16.msra.mxu0 0
        %367 = vmatpush.bf16.msra.mxu0 0
        %368 = vmatpush.bf16.msra.mxu0 0
        %369 = vmatpush.bf16.msra.mxu0 0
        %370 = vmatpush.bf16.msra.mxu0 %v357
        %371 = vmatpush.bf16.msra.mxu0 %v356
        %372 = vmatmul.bf16.gmra.mxu0 %v362
        %v373 = vpop.f32.mrf.mxu0
        %v374 = vadd.f32 %v346, %v373
        %v375 = vpop.f32.mrf.mxu0
        %376 = vdwg.mxu0
        %v377 = vpack.c.bf16 %v374, %v374
        %v378 = vld [vmem:[%s293] sm:$0x1]
        %v380 = vperm.slane %v378, 0
        %v383 = vunpack.c.l.b16 %v377
        %v384 = vpack.c.b16 %v383, %v383
        %385 = vrot.lane.b32.xlu0 %v384, 96
        %v386 = vpop.permute.xlu0 %385
        %vm387 = vcmask 130048
        %v389 = vsel %vm387, %v377, 0
        %v392 = vsel %vm387, %v386, 0
        %394 = vmatpush.bf16.xpose.msra.mxu0 0
        %395 = vmatpush.bf16.xpose.msra.mxu0 0
        %396 = vmatpush.bf16.xpose.msra.mxu0 0
        %397 = vmatpush.bf16.xpose.msra.mxu0 0
        %398 = vmatpush.bf16.xpose.msra.mxu0 0
        %399 = vmatpush.bf16.xpose.msra.mxu0 0
        %400 = vmatpush.bf16.xpose.msra.mxu0 0
        %401 = vmatpush.bf16.xpose.msra.mxu0 %v392
        %402 = vmatmul.bf16.gmra.mxu0 %v389
        %v403 = vpop.f32.mrf.mxu0
        %v404 = vadd.f32 %v380, %v403
        %v405 = vpop.f32.mrf.mxu0
        %406 = vdwg.mxu0
        %vm407 = vcmask 64512
        %v408 = vsel %vm407, %v404, -inf
        %409 = vmax.xlane.f32.xlu0 %v408
        %v410 = vpop.xlane.xlu0 %409
        %v411 = vsub.f32 %v404, %v410
        %v412 = vmul.f32 %v411, 1.442695
        %v413 = vpow.pop %v412
        %v414 = vsel %vm407, %v413, 0.0
        %415 = vadd.xlane.f32.xlu0 %v414
        %v416 = vpop.xlane.xlu0 %415
        %v417 = vpack.c.bf16 %v413, %v413
        %418 = vrot.lane.b32.xlu0 %v384, 64
        %v419 = vpop.permute.xlu0 %418
        %v421 = vsel %vm407, %v417, 0
        %vm423 = vcmask 1043456
        %v425 = vsel %vm423, %v419, 0
        %427 = vmatpush.bf16.msra.mxu0 0
        %428 = vmatpush.bf16.msra.mxu0 0
        %429 = vmatpush.bf16.msra.mxu0 0
        %430 = vmatpush.bf16.msra.mxu0 0
        %431 = vmatpush.bf16.msra.mxu0 0
        %432 = vmatpush.bf16.msra.mxu0 0
        %433 = vmatpush.bf16.msra.mxu0 0
        %434 = vmatpush.bf16.msra.mxu0 %v425
        %435 = vmatmul.bf16.gmra.mxu0 %v421
        %v436 = vpop.f32.mrf.mxu0
        %v437 = vadd.f32 0.0, %v436
        %v438 = vpop.f32.mrf.mxu0
        %439 = vdwg.mxu0
        %v440 = vrcp.pop %v416
        %v441 = vmul.f32 %v437, %v440
        %v442 = vpack.c.bf16 %v441, %v441
        %443 = vrot.lane.b32.xlu0 %v384, 112
        %v444 = vpop.permute.xlu0 %443
        %445 = vrot.lane.b32.xlu0 %v384, 80
        %v446 = vpop.permute.xlu0 %445
        %v448 = vsel %vm387, %v444, 0
        %v451 = vsel %vm387, %v446, 0
        %453 = vmatpush.bf16.xpose.msra.mxu0 0
        %454 = vmatpush.bf16.xpose.msra.mxu0 0
        %455 = vmatpush.bf16.xpose.msra.mxu0 0
        %456 = vmatpush.bf16.xpose.msra.mxu0 0
        %457 = vmatpush.bf16.xpose.msra.mxu0 0
        %458 = vmatpush.bf16.xpose.msra.mxu0 0
        %459 = vmatpush.bf16.xpose.msra.mxu0 0
        %460 = vmatpush.bf16.xpose.msra.mxu0 %v451
        %461 = vmatmul.bf16.gmra.mxu0 %v448
        %v462 = vpop.f32.mrf.mxu0
        %v463 = vadd.f32 %v380, %v462
        %v464 = vpop.f32.mrf.mxu0
        %465 = vdwg.mxu0
        %v466 = vsel %vm407, %v463, -inf
        %467 = vmax.xlane.f32.xlu0 %v466
        %v468 = vpop.xlane.xlu0 %467
        %v469 = vsub.f32 %v463, %v468
        %v470 = vmul.f32 %v469, 1.442695
        %v471 = vpow.pop %v470
        %v472 = vsel %vm407, %v471, 0.0
        %473 = vadd.xlane.f32.xlu0 %v472
        %v474 = vpop.xlane.xlu0 %473
        %v475 = vpack.c.bf16 %v471, %v471
        %476 = vrot.lane.b32.xlu0 %v384, 48
        %v477 = vpop.permute.xlu0 %476
        %v479 = vsel %vm407, %v475, 0
        %v482 = vsel %vm423, %v477, 0
        %484 = vmatpush.bf16.msra.mxu0 0
        %485 = vmatpush.bf16.msra.mxu0 0
        %486 = vmatpush.bf16.msra.mxu0 0
        %487 = vmatpush.bf16.msra.mxu0 0
        %488 = vmatpush.bf16.msra.mxu0 0
        %489 = vmatpush.bf16.msra.mxu0 0
        %490 = vmatpush.bf16.msra.mxu0 0
        %491 = vmatpush.bf16.msra.mxu0 %v482
        %492 = vmatmul.bf16.gmra.mxu0 %v479
        %v493 = vpop.f32.mrf.mxu0
        %v494 = vadd.f32 0.0, %v493
        %v495 = vpop.f32.mrf.mxu0
        %496 = vdwg.mxu0
        %v497 = vrcp.pop %v474
        %v498 = vmul.f32 %v494, %v497
        %v499 = vpack.c.bf16 %v498, %v498
        %v501 = vunpack.c.l.b16 %v499
        %v502 = vpack.c.b16 %v501, %v501
        %503 = vrot.lane.b32.xlu0 %v502, 16
        %v504 = vpop.permute.xlu0 %503
        %v507 = vsel %vm387, %v442, %v504
        %v508 = vld [vmem:[#allocation8] sm:$0xf]
        %v509 = vld [vmem:[#allocation8 + $0x4] sm:$0xf]
        %v510 = vld [vmem:[#allocation8 + $0x8] sm:$0xf]
        %v511 = vld [vmem:[#allocation8 + $0xc] sm:$0xf]
        %v512 = vld [vmem:[%s5] sm:$0x1]
        %v514 = vperm.slane %v512, 0
        %v520 = vunpack.c.l.b16 %v508
        %v521 = vunpack.c.l.b16 %v509
        %v522 = vunpack.c.l.b16 %v510
        %v523 = vunpack.c.l.b16 %v511
        %v524 = vpack.c.b16 %v521, %v520
        %v525 = vpack.c.b16 %v523, %v522
        %v528 = vsel %vm360, %v507, 0
        %530 = vmatpush.bf16.msra.mxu0 0
        %531 = vmatpush.bf16.msra.mxu0 0
        %532 = vmatpush.bf16.msra.mxu0 0
        %533 = vmatpush.bf16.msra.mxu0 0
        %534 = vmatpush.bf16.msra.mxu0 0
        %535 = vmatpush.bf16.msra.mxu0 0
        %536 = vmatpush.bf16.msra.mxu0 %v525
        %537 = vmatpush.bf16.msra.mxu0 %v524
        %538 = vmatmul.bf16.gmra.mxu0 %v528
        %v539 = vpop.f32.mrf.mxu0
        %v540 = vadd.f32 %v514, %v539
        %v541 = vpop.f32.mrf.mxu0
        %542 = vdwg.mxu0
        %543 = vst.msk [vmem:[%s336] sm:$0xff] %vm360, %v540
        %s544 = sand.u32 %s171, 1
        %s545 = scalar_lea.sflag [#allocation4], %s544
        %s546 = sand.u32 %s171, 1
        %s547 = smul.addr %s546, 8
        %s548 = scalar_lea.vmem [#allocation10], %s547
        // Predicated region
        $region61: #{tpu_custom_call.1} parent=43 // pred_check
          %p549 = pneg %p181
        $region62: #{tpu_custom_call.1} parent=43 // pred_check_branch
          %551 = sbr.rel (%p549) target = $region64
        $region63: #{tpu_custom_call.1} parent=43 // pred_region
          %553 = vsyncadd %s545, 0
          %s554 = smul.addr %s27, 8
          %s555 = scalar_lea.hbm %s6, %s554
          %s557 = sshll.u32 %s548, 4
          %s558 = int_to_ptr.vmem [resolvable:$true] %s557
          %s559 = sshll.u32 %s555, 4
          %s560 = int_to_ptr.hbm [resolvable:$true] %s559
          %562 = dma.vmem_to_hbm [thread:$0]  %s558, 128, %s560, %s545
        $region64: #{tpu_custom_call.1} parent=43 // pred_fallthru
          _
      $region44: #{tpu_custom_call.1} parent=5 // pred_fallthru
        _
      %p563 = scmp.le.s32.totalorder 2, %s22
      // Predicated region
      $region65: #{tpu_custom_call.1} parent=5 // pred_check
        %p564 = pneg %p563
      $region66: #{tpu_custom_call.1} parent=5 // pred_check_branch
        %566 = sbr.rel (%p564) target = $region68
      $region67: #{tpu_custom_call.1} parent=5 // pred_region
        %s567 = ssub.s32 %s22, 2
        // Predicated region
        $region69: #{tpu_custom_call.1} parent=67 // pred_check
          %p568 = pneg %p187
        $region70: #{tpu_custom_call.1} parent=67 // pred_check_branch
          %570 = sbr.rel (%p568) target = $region72
        $region71: #{tpu_custom_call.1} parent=67 // pred_region
          %s571 = sand.u32 %s172, 1
          %s572 = scalar_lea.sflag [#allocation4], %s571
          %s573 = sand.u32 %s172, 1
          %s574 = smul.addr %s573, 8
          %s575 = scalar_lea.vmem [#allocation10], %s574
          %577 = dma.done %s572, 128
        $region72: #{tpu_custom_call.1} parent=67 // pred_fallthru
          _
      $region68: #{tpu_custom_call.1} parent=5 // pred_fallthru
        _
    $region6: #{tpu_custom_call.1} parent=1 // loop_footer
      %s26 = sadd.s32 1, %s22
    $region7: #{tpu_custom_call.1} parent=1 // loop_footer_branch
      %21 = sbr.rel target = $region3
    $region8: #{tpu_custom_call.1} parent=1 // loop_exit
      _
    %578 = vsyncpa [#allocation3], 1
    %s579 = scalar_lea.sflag [#allocation3], 1
    %580 = vsyncpa %s579, 1
    %581 = vsyncpa [#allocation6], 1
    %s582 = scalar_lea.sflag [#allocation6], 1
    %583 = vsyncpa %s582, 1
    %584 = vsyncpa [#allocation9], 1
    %585 = vsyncpa [#allocation4], 1
    %s586 = scalar_lea.sflag [#allocation4], 1
    %587 = vsyncpa %s586, 1

</llo_original>
